<compile_context>
chip_gen: v5e
topology: v5e:2x2
jax: 0.10.0
libtpu: 0.0.40
codegen_flags: <defaults>
</compile_context>

<pallas_src>
import functools
import math

import jax
import jax.numpy as jnp
from jax.experimental import pallas as pl
from jax.experimental.pallas import tpu as pltpu


def _pick_block(t, target):
    """Largest candidate block (<= target) that divides t; falls back to t."""
    for cand in (target, 1024, 512, 256, 128, 64, 32, 16, 8):
        if cand <= t and t % cand == 0:
            return cand
    return t


def _pick_heads_per_block(n_head, head_dim):
    """Smallest divisor of n_head whose head-group is lane-dense (hb*hd >= 128)."""
    for hb in range(1, n_head + 1):
        if n_head % hb == 0 and hb * head_dim >= 128:
            return hb
    return n_head


# -----------------------------------------------------------------------------
# 1) QKV projection with rotary folded into the weights; head-major outputs
# -----------------------------------------------------------------------------
def _qkv_kernel(x_ref, w_ref, b_ref, q_ref, k_ref, v_ref, *, n_head, head_dim):
    x = x_ref[0]                                                  # (br, C)
    y = jnp.dot(x, w_ref[...], preferred_element_type=jnp.float32)
    y = y + b_ref[...]                                            # f32 bias add
    c = n_head * head_dim
    # Per-head sliced stores -> head-major (H, br, hd) outputs, no XLA transpose.
    for h in range(n_head):
        lo = h * head_dim
        q_ref[0, h] = y[:, lo:lo + head_dim].astype(q_ref.dtype)
        k_ref[0, h] = y[:, c + lo:c + lo + head_dim].astype(k_ref.dtype)
        v_ref[0, h] = y[:, 2 * c + lo:2 * c + lo + head_dim].astype(v_ref.dtype)


def qkv_project(x, w, b, n_head, head_dim, *, block_rows=512, out_dtype):
    """x: (B,T,C), w: (C,3C), b: (1,3C) -> q,k,v each (B, H, T, hd)."""
    B, T, C = x.shape
    br = _pick_block(T, block_rows)
    H, hd = n_head, head_dim
    kernel = functools.partial(_qkv_kernel, n_head=H, head_dim=hd)
    head_shape = jax.ShapeDtypeStruct((B, H, T, hd), out_dtype)
    head_spec = pl.BlockSpec((1, H, br, hd), lambda bb, tt: (bb, 0, tt, 0))
    # TODO(synk): for very large C (v7x 64 MiB VMEM), tile C_out / single-buffer the
    # constant-index weight block (pl.Buffered(1)) instead of full-weight residency.
    return pl.pallas_call(
        kernel,
        out_shape=(head_shape, head_shape, head_shape),
        grid=(B, T // br),
        in_specs=[
            pl.BlockSpec((1, br, C), lambda bb, tt: (bb, tt, 0)),
            pl.BlockSpec((C, 3 * C), lambda bb, tt: (0, 0)),
            pl.BlockSpec((1, 3 * C), lambda bb, tt: (0, 0)),
        ],
        out_specs=(head_spec, head_spec, head_spec),
        compiler_params=pltpu.CompilerParams(
            dimension_semantics=("parallel", "parallel")),
    )(x, w, b)


# -----------------------------------------------------------------------------
# 2) Flash attention: grid (B, head_blocks, q_tiles); in-kernel causal KV loop
# -----------------------------------------------------------------------------
def _flash_attn_kernel(q_ref, k_ref, v_ref, o_ref, m_sc, l_sc, acc_sc,
                       *, block_q, block_kv, mm_dtype):
    qi = pl.program_id(2)
    neg = jnp.float32(-1e30)

    # Whole reduction happens inside one invocation -> re-init scratch every step.
    m_sc[...] = jnp.full(m_sc.shape, neg, jnp.float32)
    l_sc[...] = jnp.zeros(l_sc.shape, jnp.float32)
    acc_sc[...] = jnp.zeros(acc_sc.shape, jnp.float32)

    q = q_ref[0]                                                  # (hb, bq, hd)

    def kv_step(kti, masked):
        start = pl.multiple_of(kti * block_kv, block_kv)
        k = k_ref[0, :, pl.ds(start, block_kv), :]                # (hb, bkv, hd)
        v = v_ref[0, :, pl.ds(start, block_kv), :]
        s = jnp.einsum('hqd,hkd->hqk', q, k,
                       preferred_element_type=jnp.float32)        # (hb, bq, bkv)
        if masked:                                                # diagonal tile only
            row = jax.lax.broadcasted_iota(jnp.int32, (block_q, block_kv), 0)
            col = jax.lax.broadcasted_iota(jnp.int32, (block_q, block_kv), 1)
            s = jnp.where((row >= col)[None, :, :], s, neg)

        # online softmax update (f32 VPU/EUP math)
        m_prev = m_sc[...]
        m_new = jnp.maximum(m_prev, jnp.max(s, axis=-1, keepdims=True))
        alpha = jnp.exp(m_prev - m_new)
        p = jnp.exp(s - m_new)
        l_sc[...] = alpha * l_sc[...] + jnp.sum(p, axis=-1, keepdims=True)
        acc_sc[...] = alpha * acc_sc[...] + jnp.einsum(
            'hqk,hkd->hqd', p.astype(mm_dtype), v,
            preferred_element_type=jnp.float32)
        m_sc[...] = m_new

    # Fully-visible KV tiles (kti < qi): no element mask, trip count exactly qi
    # -> no dead grid steps, no per-KV-tile grid overhead.
    @pl.loop(0, qi)
    def _full(kti):
        kv_step(kti, masked=False)

    # Diagonal tile (kti == qi): element-wise causal mask.
    kv_step(qi, masked=True)

    # Exact normalization (runs once per (b, head-block, q-tile)).
    o_ref[0] = (acc_sc[...] / l_sc[...]).astype(o_ref.dtype)


def flash_attention(q, k, v, *, block_q=512, heads_per_block=None):
    """q,k,v: (B, H, T, hd) head-major -> (B, H, T, hd)."""
    B, H, T, hd = q.shape
    bq = _pick_block(T, block_q)
    bkv = bq                                    # square tiles for the causal logic
    nq = T // bq
    hb = heads_per_block if heads_per_block is not None else _pick_heads_per_block(H, hd)
    assert H % hb == 0
    Hb = H // hb

    kernel = functools.partial(_flash_attn_kernel, block_q=bq, block_kv=bkv,
                               mm_dtype=q.dtype)
    q_map = lambda b, hblk, qi: (b, hblk, qi, 0)
    kv_map = lambda b, hblk, qi: (b, hblk, 0, 0)   # constant across qi -> one DMA

    return pl.pallas_call(
        kernel,
        out_shape=jax.ShapeDtypeStruct((B, H, T, hd), q.dtype),
        grid=(B, Hb, nq),
        in_specs=[
            pl.BlockSpec((1, hb, bq, hd), q_map),                 # q tile
            pl.BlockSpec((1, hb, T, hd), kv_map),                 # full K (resident)
            pl.BlockSpec((1, hb, T, hd), kv_map),                 # full V (resident)
        ],
        out_specs=pl.BlockSpec((1, hb, bq, hd), q_map),
        scratch_shapes=[
            pltpu.VMEM((hb, bq, 1), jnp.float32),                 # running max m
            pltpu.VMEM((hb, bq, 1), jnp.float32),                 # running sum l
            pltpu.VMEM((hb, bq, hd), jnp.float32),                # output accumulator
        ],
        compiler_params=pltpu.CompilerParams(
            dimension_semantics=("parallel", "parallel", "parallel")),
    )(q, k, v)


# -----------------------------------------------------------------------------
# 3) Output projection consuming the head-major attention output directly
# -----------------------------------------------------------------------------
def _proj_kernel(y_ref, w_ref, b_ref, o_ref, *, n_head):
    # y_ref: (1, H, br, hd), w_ref: (H, hd, C_out): accumulate per-head matmuls
    # (equivalent to reshaping to (br, C) @ W, without the in-VMEM relayout).
    acc = jnp.dot(y_ref[0, 0], w_ref[0], preferred_element_type=jnp.float32)
    for h in range(1, n_head):
        acc = acc + jnp.dot(y_ref[0, h], w_ref[h],
                            preferred_element_type=jnp.float32)
    o_ref[0] = (acc + b_ref[...]).astype(o_ref.dtype)


def out_project(y_heads, w_heads, b, *, block_rows=512, out_dtype):
    """y_heads: (B,H,T,hd), w_heads: (H,hd,C_out), b: (1,C_out) -> (B,T,C_out)."""
    B, H, T, hd = y_heads.shape
    C_out = w_heads.shape[-1]
    br = _pick_block(T, block_rows)
    kernel = functools.partial(_proj_kernel, n_head=H)
    return pl.pallas_call(
        kernel,
        out_shape=jax.ShapeDtypeStruct((B, T, C_out), out_dtype),
        grid=(B, T // br),
        in_specs=[
            pl.BlockSpec((1, H, br, hd), lambda bb, tt: (bb, 0, tt, 0)),
            pl.BlockSpec((H, hd, C_out), lambda bb, tt: (0, 0, 0)),
            pl.BlockSpec((1, C_out), lambda bb, tt: (0, 0)),
        ],
        out_specs=pl.BlockSpec((1, br, C_out), lambda bb, tt: (bb, tt, 0)),
        compiler_params=pltpu.CompilerParams(
            dimension_semantics=("parallel", "parallel")),
    )(y_heads, w_heads, b)


# -----------------------------------------------------------------------------
# Full module forward
# -----------------------------------------------------------------------------
def causal_self_attention(x, w_attn, b_attn, w_proj, b_proj, sin, cos, n_head,
                          *, compute_dtype=jnp.bfloat16, block_q=512,
                          block_rows=512):
    B, T, C = x.shape
    H = n_head
    hd = C // H
    assert C == H * hd and hd % 2 == 0
    out_dtype = x.dtype
    mm_dtype = compute_dtype
    scale = 1.0 / math.sqrt(hd)
    half = hd // 2

    # ---- Fold the per-head rotary rotation (constant over the sequence: the
    # reference module's shape-unpacking quirk) and the 1/sqrt(hd) scale into
    # the QKV projection weights.  R_h is the (hd, hd) matrix with
    # q_rot = q @ R_h  <=>  q_rot = q*cos_h + rotate_half(q)*sin_h.
    cos32 = cos.astype(jnp.float32)                               # (H, hd)
    sin32 = sin.astype(jnp.float32)
    eye = jnp.eye(hd, dtype=jnp.float32)
    idx = jnp.arange(half)
    perm = jnp.zeros((hd, hd), jnp.float32)
    perm = perm.at[idx + half, idx].set(-1.0)                     # j<half : -q[j+half]
    perm = perm.at[idx, idx + half].set(1.0)                      # j>=half: +q[j-half]
    rot = eye[None] * cos32[:, None, :] + perm[None] * sin32[:, None, :]  # (H,hd,hd)

    w32 = w_attn.astype(jnp.float32)
    b32 = b_attn.astype(jnp.float32).reshape(3 * C)

    def fold(w_cols, b_cols, s):
        wf = jnp.einsum('chd,hde->che', w_cols.reshape(C, H, hd), rot) * s
        bf = jnp.einsum('hd,hde->he', b_cols.reshape(H, hd), rot) * s
        return wf.reshape(C, C), bf.reshape(C)

    w_q, b_q = fold(w32[:, :C], b32[:C], scale)                   # scale on Q side
    w_k, b_k = fold(w32[:, C:2 * C], b32[C:2 * C], 1.0)
    w_eff = jnp.concatenate([w_q, w_k, w32[:, 2 * C:]], axis=1)   # (C, 3C)
    b_eff = jnp.concatenate([b_q, b_k, b32[2 * C:]], axis=0)[None, :]  # (1, 3C) f32

    # 1) QKV projection + rotary (folded) + head split -> (B, H, T, hd) x3
    q, k, v = qkv_project(x.astype(mm_dtype), w_eff.astype(mm_dtype), b_eff,
                          H, hd, block_rows=block_rows, out_dtype=mm_dtype)

    # 2) causal flash attention (in-kernel KV loop, head-blocked)
    o = flash_attention(q, k, v, block_q=block_q)                 # (B, H, T, hd)

    # 3) output projection consuming head-major layout directly
    w_proj_h = w_proj.astype(mm_dtype).reshape(H, hd, C)
    return out_project(o, w_proj_h, b_proj.astype(jnp.float32),
                       block_rows=block_rows, out_dtype=out_dtype)


def rotary_sin_cos(n_head, head_dim):
    # Faithfully reproduces the reference: "block_size" seen by the rotary module
    # is actually n_head, so angle = head_index * inv_freq (constant over seq).
    inv_freq = 1.0 / (10000.0 ** (jnp.arange(0, head_dim, 2,
                                             dtype=jnp.float32) / head_dim))
    pos = jnp.arange(n_head, dtype=jnp.float32)
    freqs = jnp.einsum('i,j->ij', pos, inv_freq)                  # (n_head, hd/2)
    emb = jnp.concatenate([freqs, freqs], axis=-1)                # (n_head, hd)
    return jnp.sin(emb), jnp.cos(emb)


def reference(x, w_attn, b_attn, w_proj, b_proj, sin, cos, n_head):
    # pure-JAX reference mirroring the PyTorch forward
    B, T, C = x.shape
    hd = C // n_head
    qkv = x @ w_attn + b_attn[0]
    q, k, v = jnp.split(qkv, 3, axis=-1)
    q = q.reshape(B, T, n_head, hd).transpose(0, 2, 1, 3)         # (B, H, T, hd)
    k = k.reshape(B, T, n_head, hd).transpose(0, 2, 1, 3)
    v = v.reshape(B, T, n_head, hd).transpose(0, 2, 1, 3)

    def rot_half(t):
        t1, t2 = jnp.split(t, 2, axis=-1)
        return jnp.concatenate([-t2, t1], axis=-1)

    s_ = sin[None, :, None, :]
    c_ = cos[None, :, None, :]
    q = q * c_ + rot_half(q) * s_
    k = k * c_ + rot_half(k) * s_

    att = jnp.einsum('bhtd,bhsd->bhts', q, k) / math.sqrt(hd)
    mask = jnp.tril(jnp.ones((T, T), dtype=bool))
    att = jnp.where(mask, att, -jnp.inf)
    att = jax.nn.softmax(att, axis=-1)
    y = jnp.einsum('bhts,bhsd->bhtd', att, v)
    y = y.transpose(0, 2, 1, 3).reshape(B, T, C)
    return y @ w_proj + b_proj[0]


if __name__ == "__main__":
    # small config: n_embd=32, n_head=4, block_size(T)=8, batch=2
    B, T, C, n_head = 2, 8, 32, 4
    hd = C // n_head

    key = jax.random.PRNGKey(0)
    kx, k1, k2, k3, k4 = jax.random.split(key, 5)
    x = jax.random.normal(kx, (B, T, C), dtype=jnp.float32)
    w_attn = jax.random.normal(k1, (C, 3 * C), dtype=jnp.float32) * 0.02
    b_attn = jax.random.normal(k2, (1, 3 * C), dtype=jnp.float32) * 0.02
    w_proj = jax.random.normal(k3, (C, C), dtype=jnp.float32) * 0.02
    b_proj = jax.random.normal(k4, (1, C), dtype=jnp.float32) * 0.02
    sin, cos = rotary_sin_cos(n_head, hd)

    y_ref = reference(x, w_attn, b_attn, w_proj, b_proj, sin, cos, n_head)

    # full-precision path (f32 MXU inputs): tight check
    y32 = causal_self_attention(x, w_attn, b_attn, w_proj, b_proj, sin, cos,
                                n_head, compute_dtype=jnp.float32)
    y32 = jax.block_until_ready(y32)
    assert y32.shape == (B, T, C)
    err32 = float(jnp.max(jnp.abs(y32 - y_ref)))
    assert jnp.allclose(y32, y_ref, atol=2e-3, rtol=2e-3), err32

    # default bf16 MXU-input path (f32 accumulation, f32 softmax math)
    y16 = causal_self_attention(x, w_attn, b_attn, w_proj, b_proj, sin, cos,
                                n_head)
    y16 = jax.block_until_ready(y16)
    assert y16.shape == (B, T, C)
    assert bool(jnp.all(jnp.isfinite(y16)))
    err16 = float(jnp.max(jnp.abs(y16.astype(jnp.float32) - y_ref)))
    assert jnp.allclose(y16.astype(jnp.float32), y_ref, atol=2e-2, rtol=5e-2), err16

    print("KERNEL_OK")
</pallas_src>

<mosaic_0001>
module attributes {stable_mosaic.version = 11 : i64} {
  func.func @_qkv_kernel(%arg0: i32, %arg1: i32, %arg2: memref<1x8x32xf32, #tpu.memory_space<vmem>>, %arg3: memref<32x96xf32, #tpu.memory_space<vmem>>, %arg4: memref<1x96xf32, #tpu.memory_space<vmem>>, %arg5: memref<1x4x8x8xf32, #tpu.memory_space<vmem>>, %arg6: memref<1x4x8x8xf32, #tpu.memory_space<vmem>>, %arg7: memref<1x4x8x8xf32, #tpu.memory_space<vmem>>) attributes {dimension_semantics = [#tpu.dimension_semantics<parallel>, #tpu.dimension_semantics<parallel>], iteration_bounds = array<i64: 2, 1>, scalar_prefetch = 0 : i64, scratch_operands = 0 : i64, tpu.core_type = #tpu.core_type<tc>, window_params = [{transform_indices = @transform_0, window_bounds = array<i64: 1, 8, 32>}, {pipeline_mode = #tpu.pipeline_mode<synchronous>, transform_indices = @transform_1, window_bounds = array<i64: 32, 96>}, {pipeline_mode = #tpu.pipeline_mode<synchronous>, transform_indices = @transform_2, window_bounds = array<i64: 1, 96>}, {transform_indices = @transform_3, window_bounds = array<i64: 1, 4, 8, 8>}, {transform_indices = @transform_4, window_bounds = array<i64: 1, 4, 8, 8>}, {transform_indices = @transform_5, window_bounds = array<i64: 1, 4, 8, 8>}]} {
    %c0 = arith.constant 0 : index
    %c0_0 = arith.constant 0 : index
    %c0_1 = arith.constant 0 : index
    %0 = vector.load %arg2[%c0, %c0_0, %c0_1] : memref<1x8x32xf32, #tpu.memory_space<vmem>>, vector<1x8x32xf32>
    %1 = vector.shape_cast %0 : vector<1x8x32xf32> to vector<8x32xf32>
    %c0_2 = arith.constant 0 : index
    %c0_3 = arith.constant 0 : index
    %2 = vector.load %arg3[%c0_2, %c0_3] : memref<32x96xf32, #tpu.memory_space<vmem>>, vector<32x96xf32>
    %cst = arith.constant dense<0.000000e+00> : vector<8x96xf32>
    %3 = tpu.matmul %1, %2, %cst {dimension_numbers = #tpu.dot_dimension_numbers<[1], [0], [0], [1], [0, 0, 1, 1], [], []>} : vector<8x32xf32>, vector<32x96xf32>, vector<8x96xf32> -> vector<8x96xf32>
    %c0_4 = arith.constant 0 : index
    %c0_5 = arith.constant 0 : index
    %4 = vector.load %arg4[%c0_4, %c0_5] : memref<1x96xf32, #tpu.memory_space<vmem>>, vector<1x96xf32>
    %5 = vector.broadcast %4 : vector<1x96xf32> to vector<8x96xf32>
    %6 = arith.addf %3, %5 : vector<8x96xf32>
    %7 = vector.extract_strided_slice %6 {offsets = [0, 0], sizes = [8, 8], strides = [1, 1]} : vector<8x96xf32> to vector<8x8xf32>
    %c0_6 = arith.constant 0 : index
    %c0_7 = arith.constant 0 : index
    %c0_8 = arith.constant 0 : index
    %c0_9 = arith.constant 0 : index
    %8 = vector.load %arg5[%c0_6, %c0_7, %c0_8, %c0_9] : memref<1x4x8x8xf32, #tpu.memory_space<vmem>>, vector<1x1x8x8xf32>
    %9 = vector.shape_cast %8 : vector<1x1x8x8xf32> to vector<8x8xf32>
    %10 = vector.shape_cast %7 : vector<8x8xf32> to vector<1x1x8x8xf32>
    tpu.vector_store %arg5[%c0_6, %c0_7, %c0_8, %c0_9], %10 {strides = array<i32>} : memref<1x4x8x8xf32, #tpu.memory_space<vmem>>, vector<1x1x8x8xf32>,
    %11 = vector.extract_strided_slice %6 {offsets = [0, 32], sizes = [8, 8], strides = [1, 1]} : vector<8x96xf32> to vector<8x8xf32>
    %c0_10 = arith.constant 0 : index
    %c0_11 = arith.constant 0 : index
    %c0_12 = arith.constant 0 : index
    %c0_13 = arith.constant 0 : index
    %12 = vector.load %arg6[%c0_10, %c0_11, %c0_12, %c0_13] : memref<1x4x8x8xf32, #tpu.memory_space<vmem>>, vector<1x1x8x8xf32>
    %13 = vector.shape_cast %12 : vector<1x1x8x8xf32> to vector<8x8xf32>
    %14 = vector.shape_cast %11 : vector<8x8xf32> to vector<1x1x8x8xf32>
    tpu.vector_store %arg6[%c0_10, %c0_11, %c0_12, %c0_13], %14 {strides = array<i32>} : memref<1x4x8x8xf32, #tpu.memory_space<vmem>>, vector<1x1x8x8xf32>,
    %15 = vector.extract_strided_slice %6 {offsets = [0, 64], sizes = [8, 8], strides = [1, 1]} : vector<8x96xf32> to vector<8x8xf32>
    %c0_14 = arith.constant 0 : index
    %c0_15 = arith.constant 0 : index
    %c0_16 = arith.constant 0 : index
    %c0_17 = arith.constant 0 : index
    %16 = vector.load %arg7[%c0_14, %c0_15, %c0_16, %c0_17] : memref<1x4x8x8xf32, #tpu.memory_space<vmem>>, vector<1x1x8x8xf32>
    %17 = vector.shape_cast %16 : vector<1x1x8x8xf32> to vector<8x8xf32>
    %18 = vector.shape_cast %15 : vector<8x8xf32> to vector<1x1x8x8xf32>
    tpu.vector_store %arg7[%c0_14, %c0_15, %c0_16, %c0_17], %18 {strides = array<i32>} : memref<1x4x8x8xf32, #tpu.memory_space<vmem>>, vector<1x1x8x8xf32>,
    %19 = vector.extract_strided_slice %6 {offsets = [0, 8], sizes = [8, 8], strides = [1, 1]} : vector<8x96xf32> to vector<8x8xf32>
    %c0_18 = arith.constant 0 : index
    %c1 = arith.constant 1 : index
    %c0_19 = arith.constant 0 : index
    %c0_20 = arith.constant 0 : index
    %20 = vector.load %arg5[%c0_18, %c1, %c0_19, %c0_20] : memref<1x4x8x8xf32, #tpu.memory_space<vmem>>, vector<1x1x8x8xf32>
    %21 = vector.shape_cast %20 : vector<1x1x8x8xf32> to vector<8x8xf32>
    %22 = vector.shape_cast %19 : vector<8x8xf32> to vector<1x1x8x8xf32>
    tpu.vector_store %arg5[%c0_18, %c1, %c0_19, %c0_20], %22 {strides = array<i32>} : memref<1x4x8x8xf32, #tpu.memory_space<vmem>>, vector<1x1x8x8xf32>,
    %23 = vector.extract_strided_slice %6 {offsets = [0, 40], sizes = [8, 8], strides = [1, 1]} : vector<8x96xf32> to vector<8x8xf32>
    %c0_21 = arith.constant 0 : index
    %c1_22 = arith.constant 1 : index
    %c0_23 = arith.constant 0 : index
    %c0_24 = arith.constant 0 : index
    %24 = vector.load %arg6[%c0_21, %c1_22, %c0_23, %c0_24] : memref<1x4x8x8xf32, #tpu.memory_space<vmem>>, vector<1x1x8x8xf32>
    %25 = vector.shape_cast %24 : vector<1x1x8x8xf32> to vector<8x8xf32>
    %26 = vector.shape_cast %23 : vector<8x8xf32> to vector<1x1x8x8xf32>
    tpu.vector_store %arg6[%c0_21, %c1_22, %c0_23, %c0_24], %26 {strides = array<i32>} : memref<1x4x8x8xf32, #tpu.memory_space<vmem>>, vector<1x1x8x8xf32>,
    %27 = vector.extract_strided_slice %6 {offsets = [0, 72], sizes = [8, 8], strides = [1, 1]} : vector<8x96xf32> to vector<8x8xf32>
    %c0_25 = arith.constant 0 : index
    %c1_26 = arith.constant 1 : index
    %c0_27 = arith.constant 0 : index
    %c0_28 = arith.constant 0 : index
    %28 = vector.load %arg7[%c0_25, %c1_26, %c0_27, %c0_28] : memref<1x4x8x8xf32, #tpu.memory_space<vmem>>, vector<1x1x8x8xf32>
    %29 = vector.shape_cast %28 : vector<1x1x8x8xf32> to vector<8x8xf32>
    %30 = vector.shape_cast %27 : vector<8x8xf32> to vector<1x1x8x8xf32>
    tpu.vector_store %arg7[%c0_25, %c1_26, %c0_27, %c0_28], %30 {strides = array<i32>} : memref<1x4x8x8xf32, #tpu.memory_space<vmem>>, vector<1x1x8x8xf32>,
    %31 = vector.extract_strided_slice %6 {offsets = [0, 16], sizes = [8, 8], strides = [1, 1]} : vector<8x96xf32> to vector<8x8xf32>
    %c0_29 = arith.constant 0 : index
    %c2 = arith.constant 2 : index
    %c0_30 = arith.constant 0 : index
    %c0_31 = arith.constant 0 : index
    %32 = vector.load %arg5[%c0_29, %c2, %c0_30, %c0_31] : memref<1x4x8x8xf32, #tpu.memory_space<vmem>>, vector<1x1x8x8xf32>
    %33 = vector.shape_cast %32 : vector<1x1x8x8xf32> to vector<8x8xf32>
    %34 = vector.shape_cast %31 : vector<8x8xf32> to vector<1x1x8x8xf32>
    tpu.vector_store %arg5[%c0_29, %c2, %c0_30, %c0_31], %34 {strides = array<i32>} : memref<1x4x8x8xf32, #tpu.memory_space<vmem>>, vector<1x1x8x8xf32>,
    %35 = vector.extract_strided_slice %6 {offsets = [0, 48], sizes = [8, 8], strides = [1, 1]} : vector<8x96xf32> to vector<8x8xf32>
    %c0_32 = arith.constant 0 : index
    %c2_33 = arith.constant 2 : index
    %c0_34 = arith.constant 0 : index
    %c0_35 = arith.constant 0 : index
    %36 = vector.load %arg6[%c0_32, %c2_33, %c0_34, %c0_35] : memref<1x4x8x8xf32, #tpu.memory_space<vmem>>, vector<1x1x8x8xf32>
    %37 = vector.shape_cast %36 : vector<1x1x8x8xf32> to vector<8x8xf32>
    %38 = vector.shape_cast %35 : vector<8x8xf32> to vector<1x1x8x8xf32>
    tpu.vector_store %arg6[%c0_32, %c2_33, %c0_34, %c0_35], %38 {strides = array<i32>} : memref<1x4x8x8xf32, #tpu.memory_space<vmem>>, vector<1x1x8x8xf32>,
    %39 = vector.extract_strided_slice %6 {offsets = [0, 80], sizes = [8, 8], strides = [1, 1]} : vector<8x96xf32> to vector<8x8xf32>
    %c0_36 = arith.constant 0 : index
    %c2_37 = arith.constant 2 : index
    %c0_38 = arith.constant 0 : index
    %c0_39 = arith.constant 0 : index
    %40 = vector.load %arg7[%c0_36, %c2_37, %c0_38, %c0_39] : memref<1x4x8x8xf32, #tpu.memory_space<vmem>>, vector<1x1x8x8xf32>
    %41 = vector.shape_cast %40 : vector<1x1x8x8xf32> to vector<8x8xf32>
    %42 = vector.shape_cast %39 : vector<8x8xf32> to vector<1x1x8x8xf32>
    tpu.vector_store %arg7[%c0_36, %c2_37, %c0_38, %c0_39], %42 {strides = array<i32>} : memref<1x4x8x8xf32, #tpu.memory_space<vmem>>, vector<1x1x8x8xf32>,
    %43 = vector.extract_strided_slice %6 {offsets = [0, 24], sizes = [8, 8], strides = [1, 1]} : vector<8x96xf32> to vector<8x8xf32>
    %c0_40 = arith.constant 0 : index
    %c3 = arith.constant 3 : index
    %c0_41 = arith.constant 0 : index
    %c0_42 = arith.constant 0 : index
    %44 = vector.load %arg5[%c0_40, %c3, %c0_41, %c0_42] : memref<1x4x8x8xf32, #tpu.memory_space<vmem>>, vector<1x1x8x8xf32>
    %45 = vector.shape_cast %44 : vector<1x1x8x8xf32> to vector<8x8xf32>
    %46 = vector.shape_cast %43 : vector<8x8xf32> to vector<1x1x8x8xf32>
    tpu.vector_store %arg5[%c0_40, %c3, %c0_41, %c0_42], %46 {strides = array<i32>} : memref<1x4x8x8xf32, #tpu.memory_space<vmem>>, vector<1x1x8x8xf32>,
    %47 = vector.extract_strided_slice %6 {offsets = [0, 56], sizes = [8, 8], strides = [1, 1]} : vector<8x96xf32> to vector<8x8xf32>
    %c0_43 = arith.constant 0 : index
    %c3_44 = arith.constant 3 : index
    %c0_45 = arith.constant 0 : index
    %c0_46 = arith.constant 0 : index
    %48 = vector.load %arg6[%c0_43, %c3_44, %c0_45, %c0_46] : memref<1x4x8x8xf32, #tpu.memory_space<vmem>>, vector<1x1x8x8xf32>
    %49 = vector.shape_cast %48 : vector<1x1x8x8xf32> to vector<8x8xf32>
    %50 = vector.shape_cast %47 : vector<8x8xf32> to vector<1x1x8x8xf32>
    tpu.vector_store %arg6[%c0_43, %c3_44, %c0_45, %c0_46], %50 {strides = array<i32>} : memref<1x4x8x8xf32, #tpu.memory_space<vmem>>, vector<1x1x8x8xf32>,
    %51 = vector.extract_strided_slice %6 {offsets = [0, 88], sizes = [8, 8], strides = [1, 1]} : vector<8x96xf32> to vector<8x8xf32>
    %c0_47 = arith.constant 0 : index
    %c3_48 = arith.constant 3 : index
    %c0_49 = arith.constant 0 : index
    %c0_50 = arith.constant 0 : index
    %52 = vector.load %arg7[%c0_47, %c3_48, %c0_49, %c0_50] : memref<1x4x8x8xf32, #tpu.memory_space<vmem>>, vector<1x1x8x8xf32>
    %53 = vector.shape_cast %52 : vector<1x1x8x8xf32> to vector<8x8xf32>
    %54 = vector.shape_cast %51 : vector<8x8xf32> to vector<1x1x8x8xf32>
    tpu.vector_store %arg7[%c0_47, %c3_48, %c0_49, %c0_50], %54 {strides = array<i32>} : memref<1x4x8x8xf32, #tpu.memory_space<vmem>>, vector<1x1x8x8xf32>,
    return
  }
  func.func @transform_0(%arg0: i32, %arg1: i32) -> (i32, i32, i32) {
    %c0_i32 = arith.constant 0 : i32
    %c0_i32_0 = arith.constant 0 : i32
    return %arg0, %arg1, %c0_i32 : i32, i32, i32
  }
  func.func @transform_1(%arg0: i32, %arg1: i32) -> (i32, i32) {
    %c0_i32 = arith.constant 0 : i32
    %c0_i32_0 = arith.constant 0 : i32
    %c0_i32_1 = arith.constant 0 : i32
    return %c0_i32, %c0_i32_0 : i32, i32
  }
  func.func @transform_2(%arg0: i32, %arg1: i32) -> (i32, i32) {
    %c0_i32 = arith.constant 0 : i32
    %c0_i32_0 = arith.constant 0 : i32
    %c0_i32_1 = arith.constant 0 : i32
    return %c0_i32, %c0_i32_0 : i32, i32
  }
  func.func @transform_3(%arg0: i32, %arg1: i32) -> (i32, i32, i32, i32) {
    %c0_i32 = arith.constant 0 : i32
    %c0_i32_0 = arith.constant 0 : i32
    %c0_i32_1 = arith.constant 0 : i32
    return %arg0, %c0_i32, %arg1, %c0_i32_0 : i32, i32, i32, i32
  }
  func.func @transform_4(%arg0: i32, %arg1: i32) -> (i32, i32, i32, i32) {
    %c0_i32 = arith.constant 0 : i32
    %c0_i32_0 = arith.constant 0 : i32
    %c0_i32_1 = arith.constant 0 : i32
    return %arg0, %c0_i32, %arg1, %c0_i32_0 : i32, i32, i32, i32
  }
  func.func @transform_5(%arg0: i32, %arg1: i32) -> (i32, i32, i32, i32) {
    %c0_i32 = arith.constant 0 : i32
    %c0_i32_0 = arith.constant 0 : i32
    %c0_i32_1 = arith.constant 0 : i32
    return %arg0, %c0_i32, %arg1, %c0_i32_0 : i32, i32, i32, i32
  }
}

</mosaic_0001>

<llo_original>
// kernel: tpu_custom_call.1
$region0: #{tpu_custom_call.1}
  #allocation0 [shape = 'u32[]', space=smem, size = 0x4, offset = 0x4, fixed_abs, tag = 'smem constant byte address 0x4 - core index']
  #allocation1 [shape = 'u32[72,128]{1,0:T(1,128)}', space=vmem, size = 0x9000, scoped, tag = 'internal scratch']
  %s0 = inlined_call_operand.hbm [shape: f32[2,8,32], index: 0, kind: input, shape index: {}]
  %s1 = inlined_call_operand.hbm [shape: f32[32,96], index: 1, kind: input, shape index: {}]
  %s2 = inlined_call_operand.vmem [shape: f32[1,96], index: 2, kind: input, shape index: {}]
  %s3 = inlined_call_operand.hbm [shape: f32[2,4,8,8], index: 3, kind: output, shape index: {0}]
  %s4 = inlined_call_operand.hbm [shape: f32[2,4,8,8], index: 4, kind: output, shape index: {1}]
  %s5 = inlined_call_operand.hbm [shape: f32[2,4,8,8], index: 5, kind: output, shape index: {2}]
  %6 = xla_tuple %s3, %s4, %s5
  %s7 = sld [smem:[#allocation0]]
  $region69: #{tpu_custom_call.1} parent=0
    _
  %s9 = ssub.s32 1, %s7
  %s10 = scalar_select 0, %s9, %s7
  $region1: #{tpu_custom_call.1} parent=0
    #allocation2 [shape = 'u8[8192]{0}', space=vmem, size = 0x2000, scoped, tag = 'input window, operand 0']
    #allocation3 [shape = 's32[2]{0}', space=sflag, size = 0x8, scoped, tag = 'scoped memory for tpu_custom_call.1']
    #allocation4 [shape = 's32[2]{0}', space=sflag, size = 0x8, scoped, tag = 'scoped memory for tpu_custom_call.1']
    #allocation5 [shape = 'u8[16384]{0}', space=vmem, size = 0x4000, scoped, tag = 'input window, operand 1, single buffered']
    #allocation6 [shape = 's32[1]{0}', space=sflag, size = 0x4, scoped, tag = 'scoped memory for tpu_custom_call.1']
    #allocation7 [shape = 'u8[32768]{0}', space=vmem, size = 0x8000, scoped, tag = 'output window, operand 0']
    #allocation8 [shape = 'u8[32768]{0}', space=vmem, size = 0x8000, scoped, tag = 'output window, operand 1']
    #allocation9 [shape = 's32[2]{0}', space=sflag, size = 0x8, scoped, tag = 'scoped memory for tpu_custom_call.1']
    #allocation10 [shape = 'u8[32768]{0}', space=vmem, size = 0x8000, scoped, tag = 'output window, operand 2']
    %11 = vsyncpa [#allocation3], 0
    %s12 = scalar_lea.sflag [#allocation3], 1
    %13 = vsyncpa %s12, 0
    %14 = vsyncpa [#allocation6], 0
    %15 = vsyncpa [#allocation4], 0
    %s16 = scalar_lea.sflag [#allocation4], 1
    %17 = vsyncpa %s16, 0
    %18 = vsyncpa [#allocation9], 0
    %s19 = scalar_lea.sflag [#allocation9], 1
    %20 = vsyncpa %s19, 0
    loop: start=0, step=1, limit=4
    $region2: #{tpu_custom_call.1} parent=1 // loop_pre_header
      _
    $region3: #{tpu_custom_call.1} parent=1 // loop_header
      %s22 = sphi 0, %s26
      %p23 = scmp.ge.s32.totalorder %s22, 4
      %s29 = sphi 0, %s41
      %s30 = sphi 0, %s37
      %s31 = sphi 0, %s29
      %s32 = sphi 0, %s30
      %s33 = sphi 0, %s31
      %s34 = sphi 0, %s32
      %s46 = sphi 0, %s48
      %s49 = sphi 0, %s46
      %s50 = sphi 0, %s49
      %s66 = sphi 0, %s50
      %s70 = sphi 0, %s70
      %s72 = sphi 0, %s70
      %s73 = sphi 0, %s72
      %s87 = sphi 0, %s73
      %s91 = sphi 0, %s91
      %s93 = sphi 0, %s91
      %s94 = sphi 0, %s93
      %s108 = sphi 0, %s94
      %s116 = sphi 0, %s118
      %s119 = sphi 0, %s116
      %s120 = sphi 0, %s119
      %s136 = sphi 0, %s120
      %s144 = sphi 0, %s146
      %s147 = sphi 0, %s144
      %s148 = sphi 0, %s147
      %s164 = sphi 0, %s148
      %s172 = sphi 0, %s174
      %s175 = sphi 0, %s172
      %s176 = sphi 0, %s175
      %s192 = sphi 0, %s176
    $region4: #{tpu_custom_call.1} parent=1 // loop_header_branch
      %25 = sbr.rel (%p23) target = $region8
    $region5: #{tpu_custom_call.1} parent=1 // loop_body
      %s27 = ssub.s32 %s22, 1
      %s28 = ssub.s32 %s22, 2
      %s35 = sadd.s32 1, %s30
      %p36 = scmp.ge.s32.totalorder %s35, 1
      %s37 = scalar_select %p36, 0, %s35
      %s38 = sadd.s32 1, %s29
      %s39 = scalar_select %p36, %s38, %s29
      %p40 = scmp.ge.s32.totalorder %s39, 2
      %s41 = scalar_select %p40, 0, %s39
      %s42 = ssub.s32 %s29, %s41
      %s43 = ssub.s32 %s30, %s37
      %s44 = sor.u32 %s42, %s43
      %p45 = scmp.eq.s32.totalorder %s44, 0
      %s47 = sadd.s32 %s46, 1
      %s48 = scalar_select %p45, %s46, %s47
      %p51 = pneg %p45
      %p52 = scmp.eq.s32.totalorder %s22, 1
      %p53 = por %p51, %p52
      %p54 = scmp.ne.s32.totalorder %s46, %s49
      %p55 = scmp.eq.s32.totalorder %s22, 0
      %p56 = por %p54, %p55
      %p57 = scmp.ne.s32.totalorder %s46, %s49
      %p58 = scmp.eq.s32.totalorder %s27, 1
      %p59 = por %p57, %p58
      %p60 = scmp.ne.s32.totalorder %s49, %s50
      %p61 = scmp.eq.s32.totalorder %s27, 0
      %p62 = por %p60, %p61
      %p63 = scmp.ne.s32.totalorder %s49, %s50
      %p64 = scmp.eq.s32.totalorder %s28, 1
      %p65 = por %p63, %p64
      %p67 = scmp.ne.s32.totalorder %s50, %s66
      %p68 = scmp.eq.s32.totalorder %s28, 0
      %p69 = por %p67, %p68
      %s71 = sadd.s32 %s70, 1
      %p74 = scmp.eq.s32.totalorder %s22, 1
      %p75 = scmp.ne.s32.totalorder %s70, %s72
      %p76 = scmp.eq.s32.totalorder %s22, 0
      %p77 = por %p75, %p76
      %p78 = scmp.ne.s32.totalorder %s70, %s72
      %p79 = scmp.eq.s32.totalorder %s27, 1
      %p80 = por %p78, %p79
      %p81 = scmp.ne.s32.totalorder %s72, %s73
      %p82 = scmp.eq.s32.totalorder %s27, 0
      %p83 = por %p81, %p82
      %p84 = scmp.ne.s32.totalorder %s72, %s73
      %p85 = scmp.eq.s32.totalorder %s28, 1
      %p86 = por %p84, %p85
      %p88 = scmp.ne.s32.totalorder %s73, %s87
      %p89 = scmp.eq.s32.totalorder %s28, 0
      %p90 = por %p88, %p89
      %s92 = sadd.s32 %s91, 1
      %p95 = scmp.eq.s32.totalorder %s22, 1
      %p96 = scmp.ne.s32.totalorder %s91, %s93
      %p97 = scmp.eq.s32.totalorder %s22, 0
      %p98 = por %p96, %p97
      %p99 = scmp.ne.s32.totalorder %s91, %s93
      %p100 = scmp.eq.s32.totalorder %s27, 1
      %p101 = por %p99, %p100
      %p102 = scmp.ne.s32.totalorder %s93, %s94
      %p103 = scmp.eq.s32.totalorder %s27, 0
      %p104 = por %p102, %p103
      %p105 = scmp.ne.s32.totalorder %s93, %s94
      %p106 = scmp.eq.s32.totalorder %s28, 1
      %p107 = por %p105, %p106
      %p109 = scmp.ne.s32.totalorder %s94, %s108
      %p110 = scmp.eq.s32.totalorder %s28, 0
      %p111 = por %p109, %p110
      %s112 = ssub.s32 %s29, %s41
      %s113 = ssub.s32 %s30, %s37
      %s114 = sor.u32 %s112, %s113
      %p115 = scmp.eq.s32.totalorder %s114, 0
      %s117 = sadd.s32 %s116, 1
      %s118 = scalar_select %p115, %s116, %s117
      %p121 = pneg %p115
      %p122 = scmp.eq.s32.totalorder %s22, 1
      %p123 = por %p121, %p122
      %p124 = scmp.ne.s32.totalorder %s116, %s119
      %p125 = scmp.eq.s32.totalorder %s22, 0
      %p126 = por %p124, %p125
      %p127 = scmp.ne.s32.totalorder %s116, %s119
      %p128 = scmp.eq.s32.totalorder %s27, 1
      %p129 = por %p127, %p128
      %p130 = scmp.ne.s32.totalorder %s119, %s120
      %p131 = scmp.eq.s32.totalorder %s27, 0
      %p132 = por %p130, %p131
      %p133 = scmp.ne.s32.totalorder %s119, %s120
      %p134 = scmp.eq.s32.totalorder %s28, 1
      %p135 = por %p133, %p134
      %p137 = scmp.ne.s32.totalorder %s120, %s136
      %p138 = scmp.eq.s32.totalorder %s28, 0
      %p139 = por %p137, %p138
      %s140 = ssub.s32 %s29, %s41
      %s141 = ssub.s32 %s30, %s37
      %s142 = sor.u32 %s140, %s141
      %p143 = scmp.eq.s32.totalorder %s142, 0
      %s145 = sadd.s32 %s144, 1
      %s146 = scalar_select %p143, %s144, %s145
      %p149 = pneg %p143
      %p150 = scmp.eq.s32.totalorder %s22, 1
      %p151 = por %p149, %p150
      %p152 = scmp.ne.s32.totalorder %s144, %s147
      %p153 = scmp.eq.s32.totalorder %s22, 0
      %p154 = por %p152, %p153
      %p155 = scmp.ne.s32.totalorder %s144, %s147
      %p156 = scmp.eq.s32.totalorder %s27, 1
      %p157 = por %p155, %p156
      %p158 = scmp.ne.s32.totalorder %s147, %s148
      %p159 = scmp.eq.s32.totalorder %s27, 0
      %p160 = por %p158, %p159
      %p161 = scmp.ne.s32.totalorder %s147, %s148
      %p162 = scmp.eq.s32.totalorder %s28, 1
      %p163 = por %p161, %p162
      %p165 = scmp.ne.s32.totalorder %s148, %s164
      %p166 = scmp.eq.s32.totalorder %s28, 0
      %p167 = por %p165, %p166
      %s168 = ssub.s32 %s29, %s41
      %s169 = ssub.s32 %s30, %s37
      %s170 = sor.u32 %s168, %s169
      %p171 = scmp.eq.s32.totalorder %s170, 0
      %s173 = sadd.s32 %s172, 1
      %s174 = scalar_select %p171, %s172, %s173
      %p177 = pneg %p171
      %p178 = scmp.eq.s32.totalorder %s22, 1
      %p179 = por %p177, %p178
      %p180 = scmp.ne.s32.totalorder %s172, %s175
      %p181 = scmp.eq.s32.totalorder %s22, 0
      %p182 = por %p180, %p181
      %p183 = scmp.ne.s32.totalorder %s172, %s175
      %p184 = scmp.eq.s32.totalorder %s27, 1
      %p185 = por %p183, %p184
      %p186 = scmp.ne.s32.totalorder %s175, %s176
      %p187 = scmp.eq.s32.totalorder %s27, 0
      %p188 = por %p186, %p187
      %p189 = scmp.ne.s32.totalorder %s175, %s176
      %p190 = scmp.eq.s32.totalorder %s28, 1
      %p191 = por %p189, %p190
      %p193 = scmp.ne.s32.totalorder %s176, %s192
      %p194 = scmp.eq.s32.totalorder %s28, 0
      %p195 = por %p193, %p194
      %p196 = scmp.le.s32.totalorder 1, %s22
      %p197 = scmp.lt.s32.totalorder %s22, 3
      %p198 = pnand %p196, %p197
      %p199 = pneg %p198
      // Predicated region
      $region9: #{tpu_custom_call.1} parent=5 // pred_check
        _
      $region10: #{tpu_custom_call.1} parent=5 // pred_check_branch
        %201 = sbr.rel (%p198) target = $region12
      $region11: #{tpu_custom_call.1} parent=5 // pred_region
        %s202 = ssub.s32 %s22, 1
        // Predicated region
        $region13: #{tpu_custom_call.1} parent=11 // pred_check
          %p203 = pneg %p83
        $region14: #{tpu_custom_call.1} parent=11 // pred_check_branch
          %205 = sbr.rel (%p203) target = $region16
        $region15: #{tpu_custom_call.1} parent=11 // pred_region
          %207 = vsyncadd [#allocation6], 0
          %s208 = sshll.u32 %s1, 4
          %s209 = int_to_ptr.hbm [resolvable:$true] %s208
          %s210 = sshll.u32 [#allocation5], 4
          %s211 = int_to_ptr.vmem [resolvable:$true] %s210
          %216 = dma.hbm_to_vmem [thread:$0]  %s209, 512, %s211, [#allocation6], 128, 128, 8
        $region16: #{tpu_custom_call.1} parent=11 // pred_fallthru
          _
        // Predicated region
        $region17: #{tpu_custom_call.1} parent=11 // pred_check
          %p217 = pneg %p104
        $region18: #{tpu_custom_call.1} parent=11 // pred_check_branch
          %219 = sbr.rel (%p217) target = $region20
        $region19: #{tpu_custom_call.1} parent=11 // pred_region
          _
        $region20: #{tpu_custom_call.1} parent=11 // pred_fallthru
          _
      $region12: #{tpu_custom_call.1} parent=5 // pred_fallthru
        _
      %p220 = scmp.lt.s32.totalorder %s22, 2
      // Predicated region
      $region21: #{tpu_custom_call.1} parent=5 // pred_check
        %p221 = pneg %p220
      $region22: #{tpu_custom_call.1} parent=5 // pred_check_branch
        %223 = sbr.rel (%p221) target = $region24
      $region23: #{tpu_custom_call.1} parent=5 // pred_region
        // Predicated region
        $region25: #{tpu_custom_call.1} parent=23 // pred_check
          %p224 = pneg %p56
        $region26: #{tpu_custom_call.1} parent=23 // pred_check_branch
          %226 = sbr.rel (%p224) target = $region28
        $region27: #{tpu_custom_call.1} parent=23 // pred_region
          %s227 = sand.u32 %s46, 1
          %s228 = scalar_lea.sflag [#allocation3], %s227
          %s229 = sand.u32 %s46, 1
          %s230 = smul.addr %s229, 8
          %s231 = scalar_lea.vmem [#allocation2], %s230
          %233 = vsyncadd %s228, 0
          %s234 = sadd.s32 %s30, %s29
          %s235 = smul.addr %s234, 8
          %s236 = scalar_lea.hbm %s0, %s235
          %s238 = sshll.u32 %s236, 4
          %s239 = int_to_ptr.hbm [resolvable:$true] %s238
          %s240 = sshll.u32 %s231, 4
          %s241 = int_to_ptr.vmem [resolvable:$true] %s240
          %243 = dma.hbm_to_vmem [thread:$0]  %s239, 128, %s241, %s228
        $region28: #{tpu_custom_call.1} parent=23 // pred_fallthru
          _
      $region24: #{tpu_custom_call.1} parent=5 // pred_fallthru
        _
      %p244 = scmp.le.s32.totalorder 1, %s22
      %p245 = scmp.lt.s32.totalorder %s22, 3
      %p246 = pnand %p244, %p245
      %p247 = pneg %p246
      // Predicated region
      $region29: #{tpu_custom_call.1} parent=5 // pred_check
        _
      $region30: #{tpu_custom_call.1} parent=5 // pred_check_branch
        %249 = sbr.rel (%p246) target = $region32
      $region31: #{tpu_custom_call.1} parent=5 // pred_region
        %s250 = ssub.s32 %s22, 1
        %s251 = sand.u32 %s49, 1
        %s252 = scalar_lea.sflag [#allocation3], %s251
        %s253 = sand.u32 %s49, 1
        %s254 = smul.addr %s253, 8
        %s255 = scalar_lea.vmem [#allocation2], %s254
        // Predicated region
        $region33: #{tpu_custom_call.1} parent=31 // pred_check
          %p256 = pneg %p62
        $region34: #{tpu_custom_call.1} parent=31 // pred_check_branch
          %258 = sbr.rel (%p256) target = $region36
        $region35: #{tpu_custom_call.1} parent=31 // pred_region
          %260 = dma.done %s252, 128
        $region36: #{tpu_custom_call.1} parent=31 // pred_fallthru
          _
        // Predicated region
        $region37: #{tpu_custom_call.1} parent=31 // pred_check
          %p261 = pneg %p83
        $region38: #{tpu_custom_call.1} parent=31 // pred_check_branch
          %263 = sbr.rel (%p261) target = $region40
        $region39: #{tpu_custom_call.1} parent=31 // pred_region
          %265 = dma.done [#allocation6], 512
        $region40: #{tpu_custom_call.1} parent=31 // pred_fallthru
          _
        %s266 = sand.u32 %s49, 1
        %s267 = scalar_lea.sflag [#allocation3], %s266
        %s268 = sand.u32 %s49, 1
        %s269 = smul.addr %s268, 8
        %s270 = scalar_lea.vmem [#allocation2], %s269
        %p271 = pneg %p62
        %p272 = pneg %p59
        %p273 = pneg %p83
        %p274 = pneg %p80
        %p275 = pneg %p104
        %p276 = pneg %p101
        %p277 = pneg %p132
        %p278 = pneg %p129
        %s279 = sand.u32 %s119, 1
        %s280 = scalar_lea.sflag [#allocation4], %s279
        %s281 = sand.u32 %s119, 1
        %s282 = smul.addr %s281, 32
        %s283 = scalar_lea.vmem [#allocation7], %s282
        %p284 = pneg %p160
        %p285 = pneg %p157
        %s286 = sand.u32 %s27, 1
        %s287 = scalar_lea.sflag [#allocation9], %s286
        %s288 = sand.u32 %s147, 1
        %s289 = smul.addr %s288, 32
        %s290 = scalar_lea.vmem [#allocation8], %s289
        %p291 = pneg %p188
        %p292 = pneg %p185
        %s293 = sand.u32 %s27, 1
        %s294 = scalar_lea.sflag [#allocation9], %s293
        %s295 = sand.u32 %s175, 1
        %s296 = smul.addr %s295, 32
        %s297 = scalar_lea.vmem [#allocation10], %s296
        %v298 = vld [vmem:[%s255] sm:$0xff]
        %v299 = vld [vmem:[#allocation5] sm:$0xff]
        %v300 = vld [vmem:[#allocation5 + $0x8] sm:$0xff]
        %v301 = vld [vmem:[#allocation5 + $0x10] sm:$0xff]
        %v302 = vld [vmem:[#allocation5 + $0x18] sm:$0xff]
        %v303 = vld [vmem:[%s2] sm:$0x1]
        %v305 = vperm.slane %v303, 0
        %vm307 = vcmask 261120
        %v309 = vsel %vm307, %v298, 0
        %311 = vmatpush.msra.mxu0 0.0
        %312 = vmatpush.msra.mxu0 0.0
        %313 = vmatpush.msra.mxu0 0.0
        %314 = vmatpush.msra.mxu0 0.0
        %315 = vmatpush.msra.mxu0 0.0
        %316 = vmatpush.msra.mxu0 0.0
        %317 = vmatpush.msra.mxu0 0.0
        %318 = vmatpush.msra.mxu0 0.0
        %319 = vmatpush.msra.mxu0 0.0
        %320 = vmatpush.msra.mxu0 0.0
        %321 = vmatpush.msra.mxu0 0.0
        %322 = vmatpush.msra.mxu0 0.0
        %323 = vmatpush.msra.mxu0 %v302
        %324 = vmatpush.msra.mxu0 %v301
        %325 = vmatpush.msra.mxu0 %v300
        %326 = vmatpush.msra.mxu0 %v299
        %327 = vmatmul.f32.gmra.mxu0 %v309
        %v328 = vpop.f32.mrf.mxu0
        %v329 = vadd.f32 %v305, %v328
        %330 = vdwg.mxu0
        %vm331 = vcmask 64512
        %332 = vst.msk [vmem:[%s283] sm:$0xff] %vm331, %v329
        %334 = vrot.lane.b32.xlu0 %v329, 96
        %v335 = vpop.permute.xlu0 %334
        %337 = vst.msk [vmem:[%s290] sm:$0xff] %vm331, %v335
        %338 = vrot.lane.b32.xlu0 %v329, 64
        %v339 = vpop.permute.xlu0 %338
        %341 = vst.msk [vmem:[%s297] sm:$0xff] %vm331, %v339
        %342 = vrot.lane.b32.xlu0 %v329, 120
        %v343 = vpop.permute.xlu0 %342
        %s345 = scalar_lea.vmem %s283, 8 [#allocation7]
        %346 = vst.msk [vmem:[%s345] sm:$0xff] %vm331, %v343
        %347 = vrot.lane.b32.xlu0 %v329, 88
        %v348 = vpop.permute.xlu0 %347
        %s350 = scalar_lea.vmem %s290, 8 [#allocation8]
        %351 = vst.msk [vmem:[%s350] sm:$0xff] %vm331, %v348
        %352 = vrot.lane.b32.xlu0 %v329, 56
        %v353 = vpop.permute.xlu0 %352
        %s355 = scalar_lea.vmem %s297, 8 [#allocation10]
        %356 = vst.msk [vmem:[%s355] sm:$0xff] %vm331, %v353
        %357 = vrot.lane.b32.xlu0 %v329, 112
        %v358 = vpop.permute.xlu0 %357
        %s360 = scalar_lea.vmem %s283, 16 [#allocation7]
        %361 = vst.msk [vmem:[%s360] sm:$0xff] %vm331, %v358
        %362 = vrot.lane.b32.xlu0 %v329, 80
        %v363 = vpop.permute.xlu0 %362
        %s365 = scalar_lea.vmem %s290, 16 [#allocation8]
        %366 = vst.msk [vmem:[%s365] sm:$0xff] %vm331, %v363
        %367 = vrot.lane.b32.xlu0 %v329, 48
        %v368 = vpop.permute.xlu0 %367
        %s370 = scalar_lea.vmem %s297, 16 [#allocation10]
        %371 = vst.msk [vmem:[%s370] sm:$0xff] %vm331, %v368
        %372 = vrot.lane.b32.xlu0 %v329, 104
        %v373 = vpop.permute.xlu0 %372
        %s375 = scalar_lea.vmem %s283, 24 [#allocation7]
        %376 = vst.msk [vmem:[%s375] sm:$0xff] %vm331, %v373
        %377 = vrot.lane.b32.xlu0 %v329, 72
        %v378 = vpop.permute.xlu0 %377
        %s380 = scalar_lea.vmem %s290, 24 [#allocation8]
        %381 = vst.msk [vmem:[%s380] sm:$0xff] %vm331, %v378
        %382 = vrot.lane.b32.xlu0 %v329, 40
        %v383 = vpop.permute.xlu0 %382
        %s385 = scalar_lea.vmem %s297, 24 [#allocation10]
        %386 = vst.msk [vmem:[%s385] sm:$0xff] %vm331, %v383
        %s387 = sand.u32 %s119, 1
        %s388 = scalar_lea.sflag [#allocation4], %s387
        %s389 = sand.u32 %s119, 1
        %s390 = smul.addr %s389, 32
        %s391 = scalar_lea.vmem [#allocation7], %s390
        %s392 = sand.u32 %s27, 1
        %s393 = scalar_lea.sflag [#allocation9], %s392
        %s394 = sand.u32 %s147, 1
        %s395 = smul.addr %s394, 32
        %s396 = scalar_lea.vmem [#allocation8], %s395
        %s397 = sand.u32 %s27, 1
        %s398 = scalar_lea.sflag [#allocation9], %s397
        %s399 = sand.u32 %s175, 1
        %s400 = smul.addr %s399, 32
        %s401 = scalar_lea.vmem [#allocation10], %s400
        // Predicated region
        $region41: #{tpu_custom_call.1} parent=31 // pred_check
          %p402 = pneg %p129
        $region42: #{tpu_custom_call.1} parent=31 // pred_check_branch
          %404 = sbr.rel (%p402) target = $region44
        $region43: #{tpu_custom_call.1} parent=31 // pred_region
          %406 = vsyncadd %s388, 0
          %s407 = smul.addr %s31, 4
          %s408 = sadd.s32 %s32, %s407
          %s409 = smul.addr %s408, 8
          %s410 = scalar_lea.hbm %s3, %s409
          %s411 = sshll.u32 %s391, 4
          %s412 = int_to_ptr.vmem [resolvable:$true] %s411
          %s413 = sshll.u32 %s410, 4
          %s414 = int_to_ptr.hbm [resolvable:$true] %s413
          %419 = dma.vmem_to_hbm [thread:$0]  %s412, 512, %s414, %s388, 128, 128, 8
        $region44: #{tpu_custom_call.1} parent=31 // pred_fallthru
          _
        // Predicated region
        $region45: #{tpu_custom_call.1} parent=31 // pred_check
          %p420 = pneg %p157
        $region46: #{tpu_custom_call.1} parent=31 // pred_check_branch
          %422 = sbr.rel (%p420) target = $region48
        $region47: #{tpu_custom_call.1} parent=31 // pred_region
          %424 = vsyncadd %s393, 0
          %s425 = smul.addr %s31, 4
          %s426 = sadd.s32 %s32, %s425
          %s427 = smul.addr %s426, 8
          %s428 = scalar_lea.hbm %s4, %s427
          %s429 = sshll.u32 %s396, 4
          %s430 = int_to_ptr.vmem [resolvable:$true] %s429
          %s431 = sshll.u32 %s428, 4
          %s432 = int_to_ptr.hbm [resolvable:$true] %s431
          %437 = dma.vmem_to_hbm [thread:$0]  %s430, 512, %s432, %s393, 128, 128, 8
        $region48: #{tpu_custom_call.1} parent=31 // pred_fallthru
          _
        // Predicated region
        $region49: #{tpu_custom_call.1} parent=31 // pred_check
          %p438 = pneg %p185
        $region50: #{tpu_custom_call.1} parent=31 // pred_check_branch
          %440 = sbr.rel (%p438) target = $region52
        $region51: #{tpu_custom_call.1} parent=31 // pred_region
          %442 = vsyncadd %s398, 0
          %s443 = smul.addr %s31, 4
          %s444 = sadd.s32 %s32, %s443
          %s445 = smul.addr %s444, 8
          %s446 = scalar_lea.hbm %s5, %s445
          %s447 = sshll.u32 %s401, 4
          %s448 = int_to_ptr.vmem [resolvable:$true] %s447
          %s449 = sshll.u32 %s446, 4
          %s450 = int_to_ptr.hbm [resolvable:$true] %s449
          %455 = dma.vmem_to_hbm [thread:$0]  %s448, 512, %s450, %s398, 128, 128, 8
        $region52: #{tpu_custom_call.1} parent=31 // pred_fallthru
          _
      $region32: #{tpu_custom_call.1} parent=5 // pred_fallthru
        _
      %p456 = scmp.le.s32.totalorder 2, %s22
      // Predicated region
      $region53: #{tpu_custom_call.1} parent=5 // pred_check
        %p457 = pneg %p456
      $region54: #{tpu_custom_call.1} parent=5 // pred_check_branch
        %459 = sbr.rel (%p457) target = $region56
      $region55: #{tpu_custom_call.1} parent=5 // pred_region
        %s460 = ssub.s32 %s22, 2
        // Predicated region
        $region57: #{tpu_custom_call.1} parent=55 // pred_check
          %p461 = pneg %p135
        $region58: #{tpu_custom_call.1} parent=55 // pred_check_branch
          %463 = sbr.rel (%p461) target = $region60
        $region59: #{tpu_custom_call.1} parent=55 // pred_region
          %s464 = sand.u32 %s120, 1
          %s465 = scalar_lea.sflag [#allocation4], %s464
          %s466 = sand.u32 %s120, 1
          %s467 = smul.addr %s466, 32
          %s468 = scalar_lea.vmem [#allocation7], %s467
          %470 = dma.done %s465, 512
        $region60: #{tpu_custom_call.1} parent=55 // pred_fallthru
          _
        // Predicated region
        $region61: #{tpu_custom_call.1} parent=55 // pred_check
          %p471 = pneg %p163
        $region62: #{tpu_custom_call.1} parent=55 // pred_check_branch
          %473 = sbr.rel (%p471) target = $region64
        $region63: #{tpu_custom_call.1} parent=55 // pred_region
          %s474 = sand.u32 %s28, 1
          %s475 = scalar_lea.sflag [#allocation9], %s474
          %s476 = sand.u32 %s148, 1
          %s477 = smul.addr %s476, 32
          %s478 = scalar_lea.vmem [#allocation8], %s477
          %480 = dma.done %s475, 512
        $region64: #{tpu_custom_call.1} parent=55 // pred_fallthru
          _
        // Predicated region
        $region65: #{tpu_custom_call.1} parent=55 // pred_check
          %p481 = pneg %p191
        $region66: #{tpu_custom_call.1} parent=55 // pred_check_branch
          %483 = sbr.rel (%p481) target = $region68
        $region67: #{tpu_custom_call.1} parent=55 // pred_region
          %s484 = sand.u32 %s28, 1
          %s485 = scalar_lea.sflag [#allocation9], %s484
          %s486 = sand.u32 %s176, 1
          %s487 = smul.addr %s486, 32
          %s488 = scalar_lea.vmem [#allocation10], %s487
          %490 = dma.done %s485, 512
        $region68: #{tpu_custom_call.1} parent=55 // pred_fallthru
          _
      $region56: #{tpu_custom_call.1} parent=5 // pred_fallthru
        _
    $region6: #{tpu_custom_call.1} parent=1 // loop_footer
      %s26 = sadd.s32 1, %s22
    $region7: #{tpu_custom_call.1} parent=1 // loop_footer_branch
      %21 = sbr.rel target = $region3
    $region8: #{tpu_custom_call.1} parent=1 // loop_exit
      _
    %491 = vsyncpa [#allocation3], 1
    %s492 = scalar_lea.sflag [#allocation3], 1
    %493 = vsyncpa %s492, 1
    %494 = vsyncpa [#allocation6], 1
    %495 = vsyncpa [#allocation4], 1
    %s496 = scalar_lea.sflag [#allocation4], 1
    %497 = vsyncpa %s496, 1
    %498 = vsyncpa [#allocation9], 1
    %s499 = scalar_lea.sflag [#allocation9], 1
    %500 = vsyncpa %s499, 1

</llo_original>
